<compile_context>
chip_gen: v7x
topology: tpu7x:2x2x1
jax: 0.10.0
libtpu: 0.0.40
codegen_flags: <defaults>
</compile_context>

<pallas_src>
import jax
import jax.numpy as jnp
from jax.experimental import pallas as pl
from jax.experimental.pallas import tpu as pltpu


def linear_vpu_kernel(w_ref, b_ref, x_ref, o_ref):
    """o = w0*x[0] + w1*x[1] + w2*x[2] + b  on dense (TR, 128) vreg tiles.

    w_ref: (3,)          f32 in SMEM   (flattened nn.Linear weight)
    b_ref: (1,)          f32 in SMEM
    x_ref: (3, TR, 128)  f32 in VMEM   (feature-major, batch folded dense)
    o_ref: (TR, 128)     f32 in VMEM   (lane- and sublane-dense store)
    """
    w0 = w_ref[0]
    w1 = w_ref[1]
    w2 = w_ref[2]
    b = b_ref[0]
    o_ref[...] = w0 * x_ref[0] + w1 * x_ref[1] + w2 * x_ref[2] + b


def _round_up(n, m):
    return ((n + m - 1) // m) * m


def poly_model_forward(x, weight, bias, *, max_tr=1024):
    """Pallas equivalent of poly_model.forward.

    x:      (B, 3)  float32
    weight: (1, 3)  float32   (PyTorch nn.Linear convention: (out, in))
    bias:   (1,)    float32
    max_tr: row-tile cap (rows of 128 samples); must be a multiple of 8.
            Default 1024 keeps the double-buffered working set ~4 MiB
            (fits v5e 16 MiB scoped default / v7x 64 MiB physical VMEM).
    returns (B, 1)  float32
    """
    B, in_f = x.shape
    out_f, in_f_w = weight.shape
    assert in_f == 3 and in_f_w == 3 and out_f == 1
    assert max_tr % 8 == 0, "max_tr must be a multiple of 8 (sublane tiling)"

    x = x.astype(jnp.float32)

    # Fold the batch into dense (row, 128-lane) tiles.
    rows = pl.cdiv(B, 128)
    tr = rows if rows <= max_tr else max_tr        # full extent, or multiple of 8
    rows_pad = _round_up(rows, tr)
    b_pad = rows_pad * 128

    # Single fused pad+transpose copy only when needed (layout plumbing).
    if b_pad != B:
        x = jnp.pad(x, ((0, b_pad - B), (0, 0)))
    xt = x.T.reshape(in_f, rows_pad, 128)          # (3, R, 128) feature-major

    w_flat = weight.reshape(in_f).astype(jnp.float32)   # (3,) -> SMEM
    b_flat = bias.reshape(out_f).astype(jnp.float32)    # (1,) -> SMEM

    cost = pl.CostEstimate(
        flops=6 * b_pad,                  # 3 mul + 3 add per sample
        transcendentals=0,
        bytes_accessed=16 * b_pad,        # 12 B read + 4 B write per sample
    )

    out = pl.pallas_call(
        linear_vpu_kernel,
        out_shape=jax.ShapeDtypeStruct((rows_pad, 128), jnp.float32),
        grid=(rows_pad // tr,),
        in_specs=[
            pl.BlockSpec(memory_space=pltpu.MemorySpace.SMEM),   # weight scalars
            pl.BlockSpec(memory_space=pltpu.MemorySpace.SMEM),   # bias scalar
            pl.BlockSpec((in_f, tr, 128), lambda i: (0, i, 0)),  # dense x tile
        ],
        out_specs=pl.BlockSpec((tr, 128), lambda i: (i, 0)),     # dense out tile
        compiler_params=pltpu.CompilerParams(
            dimension_semantics=("parallel",),     # independent tiles (megacore)
            vmem_limit_bytes=32 * 1024 * 1024,     # explicit; well under all gens
        ),
        cost_estimate=cost,
    )(w_flat, b_flat, xt)

    return out.reshape(b_pad)[:B].reshape(B, out_f)


if __name__ == "__main__":
    key = jax.random.PRNGKey(0)
    kx, kw, kb, kx2 = jax.random.split(key, 4)

    IN, OUT = 3, 1

    # Deterministic "parameters" (shapes match nn.Linear(3, 1)):
    bound = 1.0 / jnp.sqrt(jnp.float32(IN))
    weight = jax.random.uniform(kw, (OUT, IN), jnp.float32, -bound, bound)
    bias = jax.random.uniform(kb, (OUT,), jnp.float32, -bound, bound)

    # Small case: B=8 (pads into a single dense (1, 128) tile, grid=1).
    B = 8
    x = jax.random.normal(kx, (B, IN), jnp.float32)
    out = jax.block_until_ready(poly_model_forward(x, weight, bias))
    ref = x @ weight.T + bias
    assert out.shape == (B, OUT)
    assert jnp.allclose(out, ref, atol=1e-5, rtol=1e-5)

    # Multi-tile ragged case: B=2597 with max_tr=8 -> rows=21, padded to 24,
    # grid=(3,), exercises row tiling, padding path and the parallel grid.
    B2 = 2597
    x2 = jax.random.normal(kx2, (B2, IN), jnp.float32)
    out2 = jax.block_until_ready(poly_model_forward(x2, weight, bias, max_tr=8))
    ref2 = x2 @ weight.T + bias
    assert out2.shape == (B2, OUT)
    assert jnp.allclose(out2, ref2, atol=1e-5, rtol=1e-5)

    print("KERNEL_OK")
</pallas_src>

<mosaic_0001>
module attributes {stable_mosaic.version = 11 : i64} {
  func.func @linear_vpu_kernel(%arg0: i32, %arg1: memref<3xf32, #tpu.memory_space<smem>>, %arg2: memref<1xf32, #tpu.memory_space<smem>>, %arg3: memref<3x1x128xf32, #tpu.memory_space<vmem>>, %arg4: memref<1x128xf32, #tpu.memory_space<vmem>>) attributes {dimension_semantics = [#tpu.dimension_semantics<parallel>], iteration_bounds = array<i64: 1>, scalar_prefetch = 0 : i64, scratch_operands = 0 : i64, tpu.core_type = #tpu.core_type<tc>, window_params = [{transform_indices = @transform_0, window_bounds = array<i64: 3>}, {transform_indices = @transform_1, window_bounds = array<i64: 1>}, {transform_indices = @transform_2, window_bounds = array<i64: 3, 1, 128>}, {transform_indices = @transform_3, window_bounds = array<i64: 1, 128>}]} {
    %c0 = arith.constant 0 : index
    %0 = memref.load %arg1[%c0] : memref<3xf32, #tpu.memory_space<smem>>
    %c1 = arith.constant 1 : index
    %1 = memref.load %arg1[%c1] : memref<3xf32, #tpu.memory_space<smem>>
    %c2 = arith.constant 2 : index
    %2 = memref.load %arg1[%c2] : memref<3xf32, #tpu.memory_space<smem>>
    %c0_0 = arith.constant 0 : index
    %3 = memref.load %arg2[%c0_0] : memref<1xf32, #tpu.memory_space<smem>>
    %c0_1 = arith.constant 0 : index
    %c0_2 = arith.constant 0 : index
    %c0_3 = arith.constant 0 : index
    %4 = vector.load %arg3[%c0_1, %c0_2, %c0_3] : memref<3x1x128xf32, #tpu.memory_space<vmem>>, vector<1x1x128xf32>
    %5 = vector.shape_cast %4 : vector<1x1x128xf32> to vector<1x128xf32>
    %6 = vector.broadcast %0 : f32 to vector<1x128xf32>
    %7 = arith.mulf %6, %5 : vector<1x128xf32>
    %c1_4 = arith.constant 1 : index
    %c0_5 = arith.constant 0 : index
    %c0_6 = arith.constant 0 : index
    %8 = vector.load %arg3[%c1_4, %c0_5, %c0_6] : memref<3x1x128xf32, #tpu.memory_space<vmem>>, vector<1x1x128xf32>
    %9 = vector.shape_cast %8 : vector<1x1x128xf32> to vector<1x128xf32>
    %10 = vector.broadcast %1 : f32 to vector<1x128xf32>
    %11 = arith.mulf %10, %9 : vector<1x128xf32>
    %12 = arith.addf %7, %11 : vector<1x128xf32>
    %c2_7 = arith.constant 2 : index
    %c0_8 = arith.constant 0 : index
    %c0_9 = arith.constant 0 : index
    %13 = vector.load %arg3[%c2_7, %c0_8, %c0_9] : memref<3x1x128xf32, #tpu.memory_space<vmem>>, vector<1x1x128xf32>
    %14 = vector.shape_cast %13 : vector<1x1x128xf32> to vector<1x128xf32>
    %15 = vector.broadcast %2 : f32 to vector<1x128xf32>
    %16 = arith.mulf %15, %14 : vector<1x128xf32>
    %17 = arith.addf %12, %16 : vector<1x128xf32>
    %18 = vector.broadcast %3 : f32 to vector<1x128xf32>
    %19 = arith.addf %17, %18 : vector<1x128xf32>
    %c0_10 = arith.constant 0 : index
    %c0_11 = arith.constant 0 : index
    %20 = vector.load %arg4[%c0_10, %c0_11] : memref<1x128xf32, #tpu.memory_space<vmem>>, vector<1x128xf32>
    tpu.vector_store %arg4[%c0_10, %c0_11], %19 {strides = array<i32>} : memref<1x128xf32, #tpu.memory_space<vmem>>, vector<1x128xf32>,
    return
  }
  func.func @transform_0(%arg0: i32) -> i32 {
    %c0_i32 = arith.constant 0 : i32
    %c0_i32_0 = arith.constant 0 : i32
    return %c0_i32 : i32
  }
  func.func @transform_1(%arg0: i32) -> i32 {
    %c0_i32 = arith.constant 0 : i32
    %c0_i32_0 = arith.constant 0 : i32
    return %c0_i32 : i32
  }
  func.func @transform_2(%arg0: i32) -> (i32, i32, i32) {
    %c0_i32 = arith.constant 0 : i32
    %c0_i32_0 = arith.constant 0 : i32
    %c0_i32_1 = arith.constant 0 : i32
    return %c0_i32, %arg0, %c0_i32_0 : i32, i32, i32
  }
  func.func @transform_3(%arg0: i32) -> (i32, i32) {
    %c0_i32 = arith.constant 0 : i32
    %c0_i32_0 = arith.constant 0 : i32
    return %arg0, %c0_i32 : i32, i32
  }
}

</mosaic_0001>

<llo_original>
// kernel: tpu_custom_call.1
$region0: #{tpu_custom_call.1}
  #allocation0 [shape = 'u32[]', space=smem, size = 0x4, offset = 0x4, fixed_abs, tag = 'smem constant byte address 0x4 - core index']
  #allocation1 [shape = 'u32[144,128]{1,0:T(1,128)}', space=vmem, size = 0x12000, scoped, tag = 'internal scratch']
  #allocation2 [shape = 'f32[1]{0:T(128)S(6)}', space=smem, size = 0x200, scoped, tag = 'scoped memory for tpu_custom_call.1']
  %s0 = inlined_call_operand.vmem [shape: f32[3], index: 0, kind: input, shape index: {}]
  %s1 = inlined_call_operand.<no memory space> [shape: f32[1], index: 1, kind: input, shape index: {}]
  %s2 = inlined_call_operand.vmem [shape: f32[3,1,128], index: 2, kind: input, shape index: {}]
  %s3 = inlined_call_operand.hbm [shape: f32[1,128], index: 3, kind: output, shape index: {}]
  %s4 = sld [smem:[#allocation0]]
  $region26: #{tpu_custom_call.1} parent=0
    _
  %s6 = ssub.s32 1, %s4
  %s7 = scalar_select 0, %s6, %s4
  %8 = sst [smem:[#allocation2]] %s1
  $region1: #{tpu_custom_call.1} parent=0
    #allocation3 [shape = 'u8[512]{0}', space=smem, size = 0x200, scoped, tag = 'input window, operand 0, single buffered']
    #allocation4 [shape = 's32[1]{0}', space=sflag, size = 0x4, scoped, tag = 'scoped memory for tpu_custom_call.1']
    #allocation5 [shape = 's32[1]{0}', space=sflag, size = 0x4, scoped, tag = 'scoped memory for tpu_custom_call.1']
    #allocation6 [shape = 'u8[512]{0}', space=vmem, size = 0x400, scoped, tag = 'output window, operand 0, single buffered']
    %9 = vsyncpa [#allocation5], 0
    %10 = vsyncpa [#allocation4], 0
    // Predicated region
    $region2: #{tpu_custom_call.1} parent=1 // pred_check
      _
    $region3: #{tpu_custom_call.1} parent=1 // pred_check_branch
      %12 = sbr.rel (0) target = $region5
    $region4: #{tpu_custom_call.1} parent=1 // pred_region
      %s14 = ssub.s32 16, 16
      %15 = vsyncadd [#allocation5], %s14
      %s17 = sshll.u32 %s0, 4
      %s18 = int_to_ptr.vmem [resolvable:$true] %s17
      %20 = dma.vmem_to_smem %s18, 16, [#allocation3], [#allocation5]
    $region5: #{tpu_custom_call.1} parent=1 // pred_fallthru
      _
    // Predicated region
    $region6: #{tpu_custom_call.1} parent=1 // pred_check
      _
    $region7: #{tpu_custom_call.1} parent=1 // pred_check_branch
      %22 = sbr.rel (0) target = $region9
    $region8: #{tpu_custom_call.1} parent=1 // pred_region
      _
    $region9: #{tpu_custom_call.1} parent=1 // pred_fallthru
      _
    // Predicated region
    $region10: #{tpu_custom_call.1} parent=1 // pred_check
      _
    $region11: #{tpu_custom_call.1} parent=1 // pred_check_branch
      %24 = sbr.rel (0) target = $region13
    $region12: #{tpu_custom_call.1} parent=1 // pred_region
      _
    $region13: #{tpu_custom_call.1} parent=1 // pred_fallthru
      _
    // Predicated region
    $region14: #{tpu_custom_call.1} parent=1 // pred_check
      _
    $region15: #{tpu_custom_call.1} parent=1 // pred_check_branch
      %26 = sbr.rel (0) target = $region17
    $region16: #{tpu_custom_call.1} parent=1 // pred_region
      %27 = dma.done [#allocation5], 16
    $region17: #{tpu_custom_call.1} parent=1 // pred_fallthru
      _
    %28 = sfence
    %s29 = sld [smem:[#allocation3]]
    %s30 = sld [smem:[#allocation3 + $0x1]]
    %s31 = sld [smem:[#allocation3 + $0x2]]
    %s32 = sld [smem:[#allocation2]]
    %v33 = vld [vmem:[%s2] sm:$0x1]
    %v34 = vstv %s29
    %v35 = vmul.f32 %v34, %v33
    %s36 = scalar_lea.vmem %s2, 1
    %v37 = vld [vmem:[%s36] sm:$0x1]
    %v38 = vstv %s30
    %v39 = vmul.f32 %v38, %v37
    %v40 = vadd.f32 %v35, %v39
    %s41 = scalar_lea.vmem %s2, 2
    %v42 = vld [vmem:[%s41] sm:$0x1]
    %v43 = vstv %s31
    %v44 = vmul.f32 %v43, %v42
    %v45 = vadd.f32 %v40, %v44
    %v46 = vstv %s32
    %v47 = vadd.f32 %v45, %v46
    %48 = vst [vmem:[#allocation6] sm:$0x1] %v47
    // Predicated region
    $region18: #{tpu_custom_call.1} parent=1 // pred_check
      _
    $region19: #{tpu_custom_call.1} parent=1 // pred_check_branch
      %50 = sbr.rel (0) target = $region21
    $region20: #{tpu_custom_call.1} parent=1 // pred_region
      %s52 = ssub.s32 16, 16
      %53 = vsyncadd [#allocation4], %s52
      %s55 = sshll.u32 [#allocation6], 4
      %s56 = int_to_ptr.vmem [resolvable:$true] %s55
      %58 = dma.vmem_to_hbm [thread:$0]  %s56, 16, %s3, [#allocation4]
    $region21: #{tpu_custom_call.1} parent=1 // pred_fallthru
      _
    // Predicated region
    $region22: #{tpu_custom_call.1} parent=1 // pred_check
      _
    $region23: #{tpu_custom_call.1} parent=1 // pred_check_branch
      %60 = sbr.rel (0) target = $region25
    $region24: #{tpu_custom_call.1} parent=1 // pred_region
      %61 = dma.done [#allocation4], 16
    $region25: #{tpu_custom_call.1} parent=1 // pred_fallthru
      _
    %62 = vsyncpa [#allocation4], 1
    %63 = vsyncpa [#allocation5], 1

</llo_original>
